<compile_context>
chip_gen: v7x
topology: tpu7x:2x2x1
jax: 0.10.0
libtpu: 0.0.40
codegen_flags: <defaults>
</compile_context>

<pallas_src>
import functools

import jax
import jax.numpy as jnp
from jax.experimental import pallas as pl
from jax.experimental.pallas import tpu as pltpu


def _round_up(x, m):
    return ((x + m - 1) // m) * m


# ---------------------------------------------------------------------------
# One-time parameter packing (do at parameter-load time, NOT every forward).
# ---------------------------------------------------------------------------
def pack_mutan_params(wq, bq, wv, bv, *, weight_dtype=jnp.bfloat16, lane=128):
    """wq/wv: (L, O, D) in nn.Linear (out,in) layout; bq/bv: (L, O).

    Returns ((wq_slab, bq_slab, wv_slab, bv_slab), meta) with weight slabs of
    shape (D, L*O_pad) in `weight_dtype` and f32 (1, L*O_pad) bias slabs, each
    layer's O columns zero-padded to a multiple of 128.
    """
    L, O, D = wq.shape
    O_pad = _round_up(O, lane)

    def pack_w(w):
        w = jnp.transpose(w, (2, 0, 1))                       # (D, L, O)
        if O_pad != O:
            w = jnp.pad(w, ((0, 0), (0, 0), (0, O_pad - O)))
        return w.reshape(D, L * O_pad).astype(weight_dtype)

    def pack_b(b):
        if O_pad != O:
            b = jnp.pad(b, ((0, 0), (0, O_pad - O)))
        return b.reshape(1, L * O_pad).astype(jnp.float32)

    params = (pack_w(wq), pack_b(bq), pack_w(wv), pack_b(bv))
    meta = dict(num_layers=L, out_dim=O, out_dim_padded=O_pad, input_dim=D)
    return params, meta


# ---------------------------------------------------------------------------
# Kernels
# ---------------------------------------------------------------------------
def _mutan_kernel_resident(ques_ref, img_ref, wq_ref, bq_ref, wv_ref, bv_ref,
                           out_ref, *, num_layers, o_pad, compute_dtype):
    # One fused matmul per modality: (TB, D) @ (D, L*O_pad) on the MXU,
    # bf16 inputs with f32 accumulation; bias add + tanh stay f32.
    # (On v6e/v7x a bf16 tanh can relieve the EUP slot if profiling shows it
    #  is the saturating unit; not applied here — never apply on v5e.)
    hq = jnp.tanh(
        jnp.dot(ques_ref[...].astype(compute_dtype), wq_ref[...],
                preferred_element_type=jnp.float32) + bq_ref[...])
    hv = jnp.tanh(
        jnp.dot(img_ref[...].astype(compute_dtype), wv_ref[...],
                preferred_element_type=jnp.float32) + bv_ref[...])
    prod = hq * hv                                            # (TB, L*O_pad)

    # Layer reduction via lane-aligned static slices (o_pad % 128 == 0):
    # stays in vregs, no accumulator-ref round trip.
    acc = prod[:, 0:o_pad]
    for i in range(1, num_layers):
        acc = acc + prod[:, i * o_pad:(i + 1) * o_pad]
    out_ref[...] = jnp.tanh(acc).astype(out_ref.dtype)


def _mutan_kernel_ktiled(ques_ref, img_ref, wq_ref, bq_ref, wv_ref, bv_ref,
                         out_ref, accq_ref, accv_ref, *,
                         num_layers, o_pad, compute_dtype):
    # Contraction (D) tiled over the last grid axis; partial matmuls are
    # accumulated into f32 VMEM scratch; bias + tanh + product + layer-sum run
    # once at the last K step (output block is resident across K).
    k = pl.program_id(1)

    @pl.when(k == 0)
    def _():
        accq_ref[...] = jnp.zeros_like(accq_ref)
        accv_ref[...] = jnp.zeros_like(accv_ref)

    accq_ref[...] += jnp.dot(ques_ref[...].astype(compute_dtype), wq_ref[...],
                             preferred_element_type=jnp.float32)
    accv_ref[...] += jnp.dot(img_ref[...].astype(compute_dtype), wv_ref[...],
                             preferred_element_type=jnp.float32)

    @pl.when(k == pl.num_programs(1) - 1)
    def _():
        hq = jnp.tanh(accq_ref[...] + bq_ref[...])
        hv = jnp.tanh(accv_ref[...] + bv_ref[...])
        prod = hq * hv
        acc = prod[:, 0:o_pad]
        for i in range(1, num_layers):
            acc = acc + prod[:, i * o_pad:(i + 1) * o_pad]
        out_ref[...] = jnp.tanh(acc).astype(out_ref.dtype)


# ---------------------------------------------------------------------------
# Wrapper
# ---------------------------------------------------------------------------
def _choose_batch_tile(B, block_b):
    if B < 16:
        return B
    # Guarantee >= 2 grid steps (v7x megacore), multiple of 8, capped by block_b.
    tb = _round_up(-(-B // 2), 8)
    return max(8, min(tb, _round_up(block_b, 8)))


def _choose_k_tile(D):
    for tk in (512, 256, 128):
        if D % tk == 0:
            return tk
    return D  # no clean 128-multiple divisor: contract the full D in one step


def _vmem_limit(component_bytes):
    need = sum(component_bytes)
    # 2x headroom for compiler scratch / spills, floored at the 16 MiB default
    # and capped below v7x's 64 MiB physical VMEM.
    return int(min(max(2 * need + (2 << 20), 16 << 20), 56 << 20))


def mutan_fusion_packed(ques_emb, img_emb, packed_params, meta, *,
                        block_b=512, force_path=None,
                        resident_weight_budget=40 << 20):
    """ques_emb/img_emb: (B, D) f32; packed_params/meta from pack_mutan_params."""
    wq_p, bq_p, wv_p, bv_p = packed_params
    L = meta["num_layers"]
    O = meta["out_dim"]
    O_pad = meta["out_dim_padded"]
    B, D = ques_emb.shape
    LO = L * O_pad
    w_isz = jnp.dtype(wq_p.dtype).itemsize

    tb = _choose_batch_tile(B, block_b)
    n_bt = pl.cdiv(B, tb)

    resident_w_bytes = 2 * D * LO * w_isz  # single-buffered Wq + Wv slabs
    use_ktiled = (force_path == "ktiled") or (
        force_path is None and resident_w_bytes > resident_weight_budget)

    out_shape = jax.ShapeDtypeStruct((B, O_pad), jnp.float32)

    if not use_ktiled:
        kern = functools.partial(_mutan_kernel_resident, num_layers=L,
                                 o_pad=O_pad, compute_dtype=wq_p.dtype)
        vmem = _vmem_limit([
            resident_w_bytes,          # resident weight slabs (Buffered(1))
            2 * 8 * LO * 4,            # bias slabs (sublane-padded, Buffered(1))
            2 * 2 * tb * D * 4,        # double-buffered activation tiles
            2 * tb * O_pad * 4,        # double-buffered output tiles
        ])
        out = pl.pallas_call(
            kern,
            out_shape=out_shape,
            grid_spec=pl.GridSpec(
                grid=(n_bt,),
                in_specs=[
                    pl.BlockSpec((tb, D), lambda b: (b, 0)),        # ques tile
                    pl.BlockSpec((tb, D), lambda b: (b, 0)),        # img tile
                    pl.BlockSpec((D, LO), lambda b: (0, 0),
                                 pipeline_mode=pl.Buffered(1)),     # Wq slab
                    pl.BlockSpec((1, LO), lambda b: (0, 0),
                                 pipeline_mode=pl.Buffered(1)),     # bq slab
                    pl.BlockSpec((D, LO), lambda b: (0, 0),
                                 pipeline_mode=pl.Buffered(1)),     # Wv slab
                    pl.BlockSpec((1, LO), lambda b: (0, 0),
                                 pipeline_mode=pl.Buffered(1)),     # bv slab
                ],
                out_specs=pl.BlockSpec((tb, O_pad), lambda b: (b, 0)),
            ),
            compiler_params=pltpu.CompilerParams(
                dimension_semantics=("parallel",),
                vmem_limit_bytes=vmem),
        )(ques_emb, img_emb, wq_p, bq_p, wv_p, bv_p)
    else:
        tk = _choose_k_tile(D)
        n_kt = pl.cdiv(D, tk)
        kern = functools.partial(_mutan_kernel_ktiled, num_layers=L,
                                 o_pad=O_pad, compute_dtype=wq_p.dtype)
        vmem = _vmem_limit([
            2 * 2 * tk * LO * w_isz,   # double-buffered weight K-tiles
            2 * 8 * LO * 4,            # bias slabs (Buffered(1))
            2 * 2 * tb * tk * 4,       # double-buffered activation tiles
            2 * tb * O_pad * 4,        # output tiles
            2 * tb * LO * 4,           # f32 accumulator scratch (q + v)
        ])
        out = pl.pallas_call(
            kern,
            out_shape=out_shape,
            grid_spec=pl.GridSpec(
                grid=(n_bt, n_kt),
                in_specs=[
                    pl.BlockSpec((tb, tk), lambda b, k: (b, k)),    # ques tile
                    pl.BlockSpec((tb, tk), lambda b, k: (b, k)),    # img tile
                    pl.BlockSpec((tk, LO), lambda b, k: (k, 0)),    # Wq K-tile
                    pl.BlockSpec((1, LO), lambda b, k: (0, 0),
                                 pipeline_mode=pl.Buffered(1)),     # bq slab
                    pl.BlockSpec((tk, LO), lambda b, k: (k, 0)),    # Wv K-tile
                    pl.BlockSpec((1, LO), lambda b, k: (0, 0),
                                 pipeline_mode=pl.Buffered(1)),     # bv slab
                ],
                out_specs=pl.BlockSpec((tb, O_pad), lambda b, k: (b, 0)),
                scratch_shapes=[pltpu.VMEM((tb, LO), jnp.float32),
                                pltpu.VMEM((tb, LO), jnp.float32)],
            ),
            compiler_params=pltpu.CompilerParams(
                dimension_semantics=("parallel", "arbitrary"),
                vmem_limit_bytes=vmem),
        )(ques_emb, img_emb, wq_p, bq_p, wv_p, bv_p)

    if O_pad != O:
        out = out[:, :O]
    return out


# ---------------------------------------------------------------------------
# Pure-JAX reference (mirrors the PyTorch module's eval-mode forward)
# ---------------------------------------------------------------------------
def mutan_fusion_ref(ques_emb, img_emb, wq, bq, wv, bv, *, bf16_inputs):
    if bf16_inputs:
        q = ques_emb.astype(jnp.bfloat16)
        im = img_emb.astype(jnp.bfloat16)
        wq_ = wq.astype(jnp.bfloat16)
        wv_ = wv.astype(jnp.bfloat16)
    else:
        q, im, wq_, wv_ = ques_emb, img_emb, wq, wv
    acc = 0.0
    for i in range(wq.shape[0]):
        x_hv = jnp.tanh(
            jnp.dot(im, wv_[i].T, preferred_element_type=jnp.float32) + bv[i])
        x_hq = jnp.tanh(
            jnp.dot(q, wq_[i].T, preferred_element_type=jnp.float32) + bq[i])
        acc = acc + x_hq * x_hv
    return jnp.tanh(acc)


if __name__ == "__main__":
    key = jax.random.PRNGKey(0)

    def make_params(k, L, O, D):
        k_wq, k_bq, k_wv, k_bv = jax.random.split(k, 4)
        scale = 1.0 / jnp.sqrt(jnp.float32(D))
        wq = jax.random.uniform(k_wq, (L, O, D), jnp.float32, -scale, scale)
        bq = jax.random.uniform(k_bq, (L, O), jnp.float32, -scale, scale)
        wv = jax.random.uniform(k_wv, (L, O, D), jnp.float32, -scale, scale)
        bv = jax.random.uniform(k_bv, (L, O), jnp.float32, -scale, scale)
        return wq, bq, wv, bv

    k1, k2 = jax.random.split(key)

    # --- Case 1: resident-weight path; out_dim NOT a 128 multiple (exercises
    #             lane padding + wrapper slice-off). -------------------------
    kq, ki, kp = jax.random.split(k1, 3)
    B, D, O, L = 8, 32, 120, 3
    ques = jax.random.normal(kq, (B, D), dtype=jnp.float32)
    img = jax.random.normal(ki, (B, D), dtype=jnp.float32)
    wq, bq, wv, bv = make_params(kp, L, O, D)

    packed, meta = pack_mutan_params(wq, bq, wv, bv)   # packed ONCE, reused
    out = mutan_fusion_packed(ques, img, packed, meta)
    out = jax.block_until_ready(out)
    assert out.shape == (B, O)

    ref16 = mutan_fusion_ref(ques, img, wq, bq, wv, bv, bf16_inputs=True)
    assert jnp.allclose(out, ref16, atol=2e-4, rtol=2e-4), \
        "case1: mismatch vs bf16-matched reference"
    ref32 = mutan_fusion_ref(ques, img, wq, bq, wv, bv, bf16_inputs=False)
    assert jnp.allclose(out, ref32, atol=5e-2, rtol=5e-2), \
        "case1: mismatch vs f32 reference"

    # --- Case 2: K-tiled fallback path (forced), multi batch tile + multi
    #             K step. ----------------------------------------------------
    kq2, ki2, kp2 = jax.random.split(k2, 3)
    B2, D2, O2, L2 = 32, 256, 128, 2
    ques2 = jax.random.normal(kq2, (B2, D2), dtype=jnp.float32)
    img2 = jax.random.normal(ki2, (B2, D2), dtype=jnp.float32)
    wq2, bq2, wv2, bv2 = make_params(kp2, L2, O2, D2)

    packed2, meta2 = pack_mutan_params(wq2, bq2, wv2, bv2)
    out2 = mutan_fusion_packed(ques2, img2, packed2, meta2,
                               force_path="ktiled")
    out2 = jax.block_until_ready(out2)
    assert out2.shape == (B2, O2)

    ref16_2 = mutan_fusion_ref(ques2, img2, wq2, bq2, wv2, bv2,
                               bf16_inputs=True)
    assert jnp.allclose(out2, ref16_2, atol=2e-4, rtol=2e-4), \
        "case2: mismatch vs bf16-matched reference"
    ref32_2 = mutan_fusion_ref(ques2, img2, wq2, bq2, wv2, bv2,
                               bf16_inputs=False)
    assert jnp.allclose(out2, ref32_2, atol=5e-2, rtol=5e-2), \
        "case2: mismatch vs f32 reference"

    print("KERNEL_OK")
</pallas_src>

<mosaic_0001>
module attributes {stable_mosaic.version = 11 : i64} {
  func.func @_mutan_kernel_resident(%arg0: i32, %arg1: memref<8x32xf32, #tpu.memory_space<vmem>>, %arg2: memref<8x32xf32, #tpu.memory_space<vmem>>, %arg3: memref<32x384xbf16, #tpu.memory_space<vmem>>, %arg4: memref<1x384xf32, #tpu.memory_space<vmem>>, %arg5: memref<32x384xbf16, #tpu.memory_space<vmem>>, %arg6: memref<1x384xf32, #tpu.memory_space<vmem>>, %arg7: memref<8x128xf32, #tpu.memory_space<vmem>>) attributes {dimension_semantics = [#tpu.dimension_semantics<parallel>], iteration_bounds = array<i64: 1>, scalar_prefetch = 0 : i64, scratch_operands = 0 : i64, tpu.core_type = #tpu.core_type<tc>, window_params = [{transform_indices = @transform_0, window_bounds = array<i64: 8, 32>}, {transform_indices = @transform_1, window_bounds = array<i64: 8, 32>}, {pipeline_mode = #tpu.pipeline_mode<synchronous>, transform_indices = @transform_2, window_bounds = array<i64: 32, 384>}, {pipeline_mode = #tpu.pipeline_mode<synchronous>, transform_indices = @transform_3, window_bounds = array<i64: 1, 384>}, {pipeline_mode = #tpu.pipeline_mode<synchronous>, transform_indices = @transform_4, window_bounds = array<i64: 32, 384>}, {pipeline_mode = #tpu.pipeline_mode<synchronous>, transform_indices = @transform_5, window_bounds = array<i64: 1, 384>}, {transform_indices = @transform_6, window_bounds = array<i64: 8, 128>}]} {
    %c0 = arith.constant 0 : index
    %c0_0 = arith.constant 0 : index
    %0 = vector.load %arg1[%c0, %c0_0] : memref<8x32xf32, #tpu.memory_space<vmem>>, vector<8x32xf32>
    %1 = arith.truncf %0 : vector<8x32xf32> to vector<8x32xbf16>
    %c0_1 = arith.constant 0 : index
    %c0_2 = arith.constant 0 : index
    %2 = vector.load %arg3[%c0_1, %c0_2] : memref<32x384xbf16, #tpu.memory_space<vmem>>, vector<32x384xbf16>
    %cst = arith.constant dense<0.000000e+00> : vector<8x384xf32>
    %3 = tpu.matmul %1, %2, %cst {dimension_numbers = #tpu.dot_dimension_numbers<[1], [0], [0], [1], [0, 0, 1, 1], [], []>} : vector<8x32xbf16>, vector<32x384xbf16>, vector<8x384xf32> -> vector<8x384xf32>
    %c0_3 = arith.constant 0 : index
    %c0_4 = arith.constant 0 : index
    %4 = vector.load %arg4[%c0_3, %c0_4] : memref<1x384xf32, #tpu.memory_space<vmem>>, vector<1x384xf32>
    %5 = vector.broadcast %4 : vector<1x384xf32> to vector<8x384xf32>
    %6 = arith.addf %3, %5 : vector<8x384xf32>
    %7 = math.tanh %6 : vector<8x384xf32>
    %c0_5 = arith.constant 0 : index
    %c0_6 = arith.constant 0 : index
    %8 = vector.load %arg2[%c0_5, %c0_6] : memref<8x32xf32, #tpu.memory_space<vmem>>, vector<8x32xf32>
    %9 = arith.truncf %8 : vector<8x32xf32> to vector<8x32xbf16>
    %c0_7 = arith.constant 0 : index
    %c0_8 = arith.constant 0 : index
    %10 = vector.load %arg5[%c0_7, %c0_8] : memref<32x384xbf16, #tpu.memory_space<vmem>>, vector<32x384xbf16>
    %cst_9 = arith.constant dense<0.000000e+00> : vector<8x384xf32>
    %11 = tpu.matmul %9, %10, %cst_9 {dimension_numbers = #tpu.dot_dimension_numbers<[1], [0], [0], [1], [0, 0, 1, 1], [], []>} : vector<8x32xbf16>, vector<32x384xbf16>, vector<8x384xf32> -> vector<8x384xf32>
    %c0_10 = arith.constant 0 : index
    %c0_11 = arith.constant 0 : index
    %12 = vector.load %arg6[%c0_10, %c0_11] : memref<1x384xf32, #tpu.memory_space<vmem>>, vector<1x384xf32>
    %13 = vector.broadcast %12 : vector<1x384xf32> to vector<8x384xf32>
    %14 = arith.addf %11, %13 : vector<8x384xf32>
    %15 = math.tanh %14 : vector<8x384xf32>
    %16 = arith.mulf %7, %15 : vector<8x384xf32>
    %17 = vector.extract_strided_slice %16 {offsets = [0, 0], sizes = [8, 128], strides = [1, 1]} : vector<8x384xf32> to vector<8x128xf32>
    %18 = vector.extract_strided_slice %16 {offsets = [0, 128], sizes = [8, 128], strides = [1, 1]} : vector<8x384xf32> to vector<8x128xf32>
    %19 = arith.addf %17, %18 : vector<8x128xf32>
    %20 = vector.extract_strided_slice %16 {offsets = [0, 256], sizes = [8, 128], strides = [1, 1]} : vector<8x384xf32> to vector<8x128xf32>
    %21 = arith.addf %19, %20 : vector<8x128xf32>
    %22 = math.tanh %21 : vector<8x128xf32>
    %c0_12 = arith.constant 0 : index
    %c0_13 = arith.constant 0 : index
    %23 = vector.load %arg7[%c0_12, %c0_13] : memref<8x128xf32, #tpu.memory_space<vmem>>, vector<8x128xf32>
    tpu.vector_store %arg7[%c0_12, %c0_13], %22 {strides = array<i32>} : memref<8x128xf32, #tpu.memory_space<vmem>>, vector<8x128xf32>,
    return
  }
  func.func @transform_0(%arg0: i32) -> (i32, i32) {
    %c0_i32 = arith.constant 0 : i32
    %c0_i32_0 = arith.constant 0 : i32
    return %arg0, %c0_i32 : i32, i32
  }
  func.func @transform_1(%arg0: i32) -> (i32, i32) {
    %c0_i32 = arith.constant 0 : i32
    %c0_i32_0 = arith.constant 0 : i32
    return %arg0, %c0_i32 : i32, i32
  }
  func.func @transform_2(%arg0: i32) -> (i32, i32) {
    %c0_i32 = arith.constant 0 : i32
    %c0_i32_0 = arith.constant 0 : i32
    %c0_i32_1 = arith.constant 0 : i32
    return %c0_i32, %c0_i32_0 : i32, i32
  }
  func.func @transform_3(%arg0: i32) -> (i32, i32) {
    %c0_i32 = arith.constant 0 : i32
    %c0_i32_0 = arith.constant 0 : i32
    %c0_i32_1 = arith.constant 0 : i32
    return %c0_i32, %c0_i32_0 : i32, i32
  }
  func.func @transform_4(%arg0: i32) -> (i32, i32) {
    %c0_i32 = arith.constant 0 : i32
    %c0_i32_0 = arith.constant 0 : i32
    %c0_i32_1 = arith.constant 0 : i32
    return %c0_i32, %c0_i32_0 : i32, i32
  }
  func.func @transform_5(%arg0: i32) -> (i32, i32) {
    %c0_i32 = arith.constant 0 : i32
    %c0_i32_0 = arith.constant 0 : i32
    %c0_i32_1 = arith.constant 0 : i32
    return %c0_i32, %c0_i32_0 : i32, i32
  }
  func.func @transform_6(%arg0: i32) -> (i32, i32) {
    %c0_i32 = arith.constant 0 : i32
    %c0_i32_0 = arith.constant 0 : i32
    return %arg0, %c0_i32 : i32, i32
  }
}

</mosaic_0001>

<llo_original>
// kernel: tpu_custom_call.1
$region0: #{tpu_custom_call.1}
  #allocation0 [shape = 'u32[]', space=smem, size = 0x4, offset = 0x4, fixed_abs, tag = 'smem constant byte address 0x4 - core index']
  #allocation1 [shape = 'u32[144,128]{1,0:T(1,128)}', space=vmem, size = 0x12000, scoped, tag = 'internal scratch']
  %s0 = inlined_call_operand.hbm [shape: f32[8,32], index: 0, kind: input, shape index: {}]
  %s1 = inlined_call_operand.hbm [shape: f32[8,32], index: 1, kind: input, shape index: {}]
  %s2 = inlined_call_operand.hbm [shape: bf16[32,384], index: 2, kind: input, shape index: {}]
  %s3 = inlined_call_operand.vmem [shape: f32[1,384], index: 3, kind: input, shape index: {}]
  %s4 = inlined_call_operand.hbm [shape: bf16[32,384], index: 4, kind: input, shape index: {}]
  %s5 = inlined_call_operand.vmem [shape: f32[1,384], index: 5, kind: input, shape index: {}]
  %s6 = inlined_call_operand.hbm [shape: f32[8,128], index: 6, kind: output, shape index: {}]
  %s7 = sld [smem:[#allocation0]]
  $region50: #{tpu_custom_call.1} parent=0
    _
  %s9 = ssub.s32 1, %s7
  %s10 = scalar_select 0, %s9, %s7
  $region1: #{tpu_custom_call.1} parent=0
    #allocation2 [shape = 'u8[4096]{0}', space=vmem, size = 0x1000, scoped, tag = 'input window, operand 0, single buffered']
    #allocation3 [shape = 's32[1]{0}', space=sflag, size = 0x4, scoped, tag = 'scoped memory for tpu_custom_call.1']
    #allocation4 [shape = 's32[1]{0}', space=sflag, size = 0x4, scoped, tag = 'scoped memory for tpu_custom_call.1']
    #allocation5 [shape = 'u8[4096]{0}', space=vmem, size = 0x1000, scoped, tag = 'input window, operand 1, single buffered']
    #allocation6 [shape = 's32[1]{0}', space=sflag, size = 0x4, scoped, tag = 'scoped memory for tpu_custom_call.1']
    #allocation7 [shape = 'u8[24576]{0}', space=vmem, size = 0x6000, scoped, tag = 'input window, operand 2, single buffered']
    #allocation8 [shape = 'u8[24576]{0}', space=vmem, size = 0x6000, scoped, tag = 'input window, operand 4, single buffered']
    #allocation9 [shape = 's32[1]{0}', space=sflag, size = 0x4, scoped, tag = 'scoped memory for tpu_custom_call.1']
    #allocation10 [shape = 'u8[4096]{0}', space=vmem, size = 0x1000, scoped, tag = 'output window, operand 0, single buffered']
    %11 = vsyncpa [#allocation3], 0
    %12 = vsyncpa [#allocation6], 0
    %13 = vsyncpa [#allocation9], 0
    %14 = vsyncpa [#allocation4], 0
    // Predicated region
    $region2: #{tpu_custom_call.1} parent=1 // pred_check
      _
    $region3: #{tpu_custom_call.1} parent=1 // pred_check_branch
      %16 = sbr.rel (0) target = $region5
    $region4: #{tpu_custom_call.1} parent=1 // pred_region
      %s18 = ssub.s32 128, 128
      %19 = vsyncadd [#allocation3], %s18
      %s21 = sshll.u32 [#allocation2], 4
      %s22 = int_to_ptr.vmem [resolvable:$true] %s21
      %24 = dma.hbm_to_vmem [thread:$0]  %s0, 128, %s22, [#allocation3]
    $region5: #{tpu_custom_call.1} parent=1 // pred_fallthru
      _
    // Predicated region
    $region6: #{tpu_custom_call.1} parent=1 // pred_check
      _
    $region7: #{tpu_custom_call.1} parent=1 // pred_check_branch
      %26 = sbr.rel (0) target = $region9
    $region8: #{tpu_custom_call.1} parent=1 // pred_region
      %s28 = ssub.s32 128, 128
      %29 = vsyncadd [#allocation6], %s28
      %s31 = sshll.u32 [#allocation5], 4
      %s32 = int_to_ptr.vmem [resolvable:$true] %s31
      %34 = dma.hbm_to_vmem [thread:$0]  %s1, 128, %s32, [#allocation6]
    $region9: #{tpu_custom_call.1} parent=1 // pred_fallthru
      _
    // Predicated region
    $region10: #{tpu_custom_call.1} parent=1 // pred_check
      _
    $region11: #{tpu_custom_call.1} parent=1 // pred_check_branch
      %36 = sbr.rel (0) target = $region13
    $region12: #{tpu_custom_call.1} parent=1 // pred_region
      %s38 = ssub.s32 768, 768
      %39 = vsyncadd [#allocation6], %s38
      %s40 = sshll.u32 [#allocation7], 4
      %s41 = int_to_ptr.vmem [resolvable:$true] %s40
      %46 = dma.hbm_to_vmem [thread:$0]  %s2, 768, %s41, [#allocation6], 192, 192, 12
    $region13: #{tpu_custom_call.1} parent=1 // pred_fallthru
      _
    // Predicated region
    $region14: #{tpu_custom_call.1} parent=1 // pred_check
      _
    $region15: #{tpu_custom_call.1} parent=1 // pred_check_branch
      %48 = sbr.rel (0) target = $region17
    $region16: #{tpu_custom_call.1} parent=1 // pred_region
      _
    $region17: #{tpu_custom_call.1} parent=1 // pred_fallthru
      _
    // Predicated region
    $region18: #{tpu_custom_call.1} parent=1 // pred_check
      _
    $region19: #{tpu_custom_call.1} parent=1 // pred_check_branch
      %50 = sbr.rel (0) target = $region21
    $region20: #{tpu_custom_call.1} parent=1 // pred_region
      %s52 = ssub.s32 768, 768
      %53 = vsyncadd [#allocation9], %s52
      %s54 = sshll.u32 [#allocation8], 4
      %s55 = int_to_ptr.vmem [resolvable:$true] %s54
      %60 = dma.hbm_to_vmem [thread:$0]  %s4, 768, %s55, [#allocation9], 192, 192, 12
    $region21: #{tpu_custom_call.1} parent=1 // pred_fallthru
      _
    // Predicated region
    $region22: #{tpu_custom_call.1} parent=1 // pred_check
      _
    $region23: #{tpu_custom_call.1} parent=1 // pred_check_branch
      %62 = sbr.rel (0) target = $region25
    $region24: #{tpu_custom_call.1} parent=1 // pred_region
      _
    $region25: #{tpu_custom_call.1} parent=1 // pred_fallthru
      _
    // Predicated region
    $region26: #{tpu_custom_call.1} parent=1 // pred_check
      _
    $region27: #{tpu_custom_call.1} parent=1 // pred_check_branch
      %64 = sbr.rel (0) target = $region29
    $region28: #{tpu_custom_call.1} parent=1 // pred_region
      %65 = dma.done [#allocation3], 128
    $region29: #{tpu_custom_call.1} parent=1 // pred_fallthru
      _
    // Predicated region
    $region30: #{tpu_custom_call.1} parent=1 // pred_check
      _
    $region31: #{tpu_custom_call.1} parent=1 // pred_check_branch
      %67 = sbr.rel (0) target = $region33
    $region32: #{tpu_custom_call.1} parent=1 // pred_region
      %68 = dma.done [#allocation6], 128
    $region33: #{tpu_custom_call.1} parent=1 // pred_fallthru
      _
    // Predicated region
    $region34: #{tpu_custom_call.1} parent=1 // pred_check
      _
    $region35: #{tpu_custom_call.1} parent=1 // pred_check_branch
      %70 = sbr.rel (0) target = $region37
    $region36: #{tpu_custom_call.1} parent=1 // pred_region
      %71 = dma.done [#allocation6], 768
    $region37: #{tpu_custom_call.1} parent=1 // pred_fallthru
      _
    // Predicated region
    $region38: #{tpu_custom_call.1} parent=1 // pred_check
      _
    $region39: #{tpu_custom_call.1} parent=1 // pred_check_branch
      %73 = sbr.rel (0) target = $region41
    $region40: #{tpu_custom_call.1} parent=1 // pred_region
      %74 = dma.done [#allocation9], 768
    $region41: #{tpu_custom_call.1} parent=1 // pred_fallthru
      _
    %v76 = vld [vmem:[#allocation2] sm:$0xff]
    %v77 = vpack.c.bf16 %v76, %v76
    %v78 = vld [vmem:[#allocation7] sm:$0xff]
    %v79 = vld [vmem:[#allocation7 + $0x8] sm:$0xf]
    %v80 = vld [vmem:[#allocation7 + $0xc] sm:$0xff]
    %v81 = vld [vmem:[#allocation7 + $0x14] sm:$0xf]
    %v82 = vld [vmem:[#allocation7 + $0x18] sm:$0xff]
    %v83 = vld [vmem:[#allocation7 + $0x20] sm:$0xf]
    %v84 = vld [vmem:[#allocation7 + $0x24] sm:$0xff]
    %v85 = vld [vmem:[#allocation7 + $0x2c] sm:$0xf]
    %v86 = vld [vmem:[%s3] sm:$0x7]
    %v88 = vlaneseq
    %v89 = vshrl.u32 %v88, 7
    %v90 = vsub.s32 0, %v89
    %v91 = vrot.slane %v86, %v90
    %v92 = vlaneseq
    %v93 = vshrl.u32 %v92, 7
    %v94 = vsub.s32 1, %v93
    %v95 = vrot.slane %v86, %v94
    %v96 = vlaneseq
    %v97 = vshrl.u32 %v96, 7
    %v98 = vsub.s32 2, %v97
    %v99 = vrot.slane %v86, %v98
    %v111 = vunpack.c.l.b16 %v78
    %v112 = vunpack.c.h.b16 %v78
    %v113 = vunpack.c.l.b16 %v79
    %v114 = vunpack.c.l.b16 %v80
    %v115 = vunpack.c.h.b16 %v80
    %v116 = vunpack.c.l.b16 %v81
    %v117 = vunpack.c.l.b16 %v82
    %v118 = vunpack.c.h.b16 %v82
    %v119 = vunpack.c.l.b16 %v83
    %v120 = vunpack.c.l.b16 %v84
    %v121 = vunpack.c.h.b16 %v84
    %v122 = vunpack.c.l.b16 %v85
    %v123 = vpack.c.b16 %v114, %v111
    %v124 = vpack.c.b16 %v115, %v112
    %v125 = vpack.c.b16 %v116, %v113
    %v126 = vpack.c.b16 %v120, %v117
    %v127 = vpack.c.b16 %v121, %v118
    %v128 = vpack.c.b16 %v122, %v119
    %vm135 = vcmask 261120
    %v137 = vsel %vm135, %v77, 0
    %139 = vmatprep.subr.bf16.mxu0 %v124
    %140 = vmatpush1.bf16.msra.mxu0 %v123
    %141 = vmatprep.subr.bf16.mxu0 %v127
    %142 = vmatpush1.bf16.msra.mxu0 %v126
    %143 = vmatprep.subr.bf16.mxu0 0
    %144 = vmatpush1.bf16.msra.mxu0 0
    %145 = vmatprep.subr.bf16.mxu0 0
    %146 = vmatpush1.bf16.msra.mxu0 0
    %147 = vmatprep.subr.bf16.mxu0 0
    %148 = vmatpush1.bf16.msra.mxu0 0
    %149 = vmatprep.subr.bf16.mxu0 0
    %150 = vmatpush1.bf16.msra.mxu0 0
    %151 = vmatprep.subr.bf16.mxu0 0
    %152 = vmatpush1.bf16.msra.mxu0 0
    %153 = vmatprep.subr.bf16.mxu0 0
    %154 = vmatpush1.bf16.msra.mxu0 0
    %155 = vmatprep.subr.bf16.mxu0 0
    %156 = vmatpush1.bf16.msra.mxu0 0
    %157 = vmatprep.subr.bf16.mxu0 0
    %158 = vmatpush1.bf16.msra.mxu0 0
    %159 = vmatprep.subr.bf16.mxu0 0
    %160 = vmatpush1.bf16.msra.mxu0 0
    %161 = vmatprep.subr.bf16.mxu0 0
    %162 = vmatpush1.bf16.msra.mxu0 0
    %163 = vmatprep.subr.bf16.mxu0 0
    %164 = vmatpush1.bf16.msra.mxu0 0
    %165 = vmatprep.subr.bf16.mxu0 0
    %166 = vmatpush1.bf16.msra.mxu0 0
    %167 = vmatprep.subr.bf16.mxu0 0
    %168 = vmatpush1.bf16.msra.mxu0 0
    %169 = vmatprep.subr.bf16.mxu0 0
    %170 = vmatpush1.bf16.msra.mxu0 0
    %171 = vmatprep.mubr.bf16.mxu0 0
    %172 = vmatmul.mubr.bf16.gmra.mrb[0].mxu0 %v137
    %v173 = vpop.f32.mrb[0].mxu0
    %v174 = vadd.f32 %v91, %v173
    %v175 = vpop.f32.mrb[0].mxu0
    %v176 = vadd.f32 %v95, %v175
    %v177 = vpop.f32.mrb[0].mxu0
    %v178 = vpop.f32.mrb[0].mxu0
    %179 = vdwg.mxu0
    %180 = vmatprep.subr.bf16.mxu0 0
    %181 = vmatpush1.bf16.msra.mxu0 %v125
    %182 = vmatprep.subr.bf16.mxu0 0
    %183 = vmatpush1.bf16.msra.mxu0 %v128
    %184 = vmatprep.subr.bf16.mxu0 0
    %185 = vmatpush1.bf16.msra.mxu0 0
    %186 = vmatprep.subr.bf16.mxu0 0
    %187 = vmatpush1.bf16.msra.mxu0 0
    %188 = vmatprep.subr.bf16.mxu0 0
    %189 = vmatpush1.bf16.msra.mxu0 0
    %190 = vmatprep.subr.bf16.mxu0 0
    %191 = vmatpush1.bf16.msra.mxu0 0
    %192 = vmatprep.subr.bf16.mxu0 0
    %193 = vmatpush1.bf16.msra.mxu0 0
    %194 = vmatprep.subr.bf16.mxu0 0
    %195 = vmatpush1.bf16.msra.mxu0 0
    %196 = vmatprep.subr.bf16.mxu0 0
    %197 = vmatpush1.bf16.msra.mxu0 0
    %198 = vmatprep.subr.bf16.mxu0 0
    %199 = vmatpush1.bf16.msra.mxu0 0
    %200 = vmatprep.subr.bf16.mxu0 0
    %201 = vmatpush1.bf16.msra.mxu0 0
    %202 = vmatprep.subr.bf16.mxu0 0
    %203 = vmatpush1.bf16.msra.mxu0 0
    %204 = vmatprep.subr.bf16.mxu0 0
    %205 = vmatpush1.bf16.msra.mxu0 0
    %206 = vmatprep.subr.bf16.mxu0 0
    %207 = vmatpush1.bf16.msra.mxu0 0
    %208 = vmatprep.subr.bf16.mxu0 0
    %209 = vmatpush1.bf16.msra.mxu0 0
    %210 = vmatprep.subr.bf16.mxu0 0
    %211 = vmatpush1.bf16.msra.mxu0 0
    %212 = vmatprep.mubr.bf16.mxu0 0
    %213 = vmatmul.mubr.bf16.gmra.mrb[0].mxu0 %v137
    %v214 = vpop.f32.mrb[0].mxu0
    %v215 = vadd.f32 %v99, %v214
    %v216 = vpop.f32.mrb[0].mxu0
    %v217 = vpop.f32.mrb[0].mxu0
    %v218 = vpop.f32.mrb[0].mxu0
    %219 = vdwg.mxu0
    %v220 = vtanh.pop %v174
    %v221 = vtanh.pop %v176
    %v222 = vtanh.pop %v215
    %v223 = vld [vmem:[#allocation5] sm:$0xff]
    %v224 = vpack.c.bf16 %v223, %v223
    %v225 = vld [vmem:[#allocation8] sm:$0xff]
    %v226 = vld [vmem:[#allocation8 + $0x8] sm:$0xf]
    %v227 = vld [vmem:[#allocation8 + $0xc] sm:$0xff]
    %v228 = vld [vmem:[#allocation8 + $0x14] sm:$0xf]
    %v229 = vld [vmem:[#allocation8 + $0x18] sm:$0xff]
    %v230 = vld [vmem:[#allocation8 + $0x20] sm:$0xf]
    %v231 = vld [vmem:[#allocation8 + $0x24] sm:$0xff]
    %v232 = vld [vmem:[#allocation8 + $0x2c] sm:$0xf]
    %v233 = vld [vmem:[%s5] sm:$0x7]
    %v235 = vlaneseq
    %v236 = vshrl.u32 %v235, 7
    %v237 = vsub.s32 0, %v236
    %v238 = vrot.slane %v233, %v237
    %v239 = vlaneseq
    %v240 = vshrl.u32 %v239, 7
    %v241 = vsub.s32 1, %v240
    %v242 = vrot.slane %v233, %v241
    %v243 = vlaneseq
    %v244 = vshrl.u32 %v243, 7
    %v245 = vsub.s32 2, %v244
    %v246 = vrot.slane %v233, %v245
    %v258 = vunpack.c.l.b16 %v225
    %v259 = vunpack.c.h.b16 %v225
    %v260 = vunpack.c.l.b16 %v226
    %v261 = vunpack.c.l.b16 %v227
    %v262 = vunpack.c.h.b16 %v227
    %v263 = vunpack.c.l.b16 %v228
    %v264 = vunpack.c.l.b16 %v229
    %v265 = vunpack.c.h.b16 %v229
    %v266 = vunpack.c.l.b16 %v230
    %v267 = vunpack.c.l.b16 %v231
    %v268 = vunpack.c.h.b16 %v231
    %v269 = vunpack.c.l.b16 %v232
    %v270 = vpack.c.b16 %v261, %v258
    %v271 = vpack.c.b16 %v262, %v259
    %v272 = vpack.c.b16 %v263, %v260
    %v273 = vpack.c.b16 %v267, %v264
    %v274 = vpack.c.b16 %v268, %v265
    %v275 = vpack.c.b16 %v269, %v266
    %v283 = vsel %vm135, %v224, 0
    %285 = vmatprep.subr.bf16.mxu0 %v271
    %286 = vmatpush1.bf16.msra.mxu0 %v270
    %287 = vmatprep.subr.bf16.mxu0 %v274
    %288 = vmatpush1.bf16.msra.mxu0 %v273
    %289 = vmatprep.subr.bf16.mxu0 0
    %290 = vmatpush1.bf16.msra.mxu0 0
    %291 = vmatprep.subr.bf16.mxu0 0
    %292 = vmatpush1.bf16.msra.mxu0 0
    %293 = vmatprep.subr.bf16.mxu0 0
    %294 = vmatpush1.bf16.msra.mxu0 0
    %295 = vmatprep.subr.bf16.mxu0 0
    %296 = vmatpush1.bf16.msra.mxu0 0
    %297 = vmatprep.subr.bf16.mxu0 0
    %298 = vmatpush1.bf16.msra.mxu0 0
    %299 = vmatprep.subr.bf16.mxu0 0
    %300 = vmatpush1.bf16.msra.mxu0 0
    %301 = vmatprep.subr.bf16.mxu0 0
    %302 = vmatpush1.bf16.msra.mxu0 0
    %303 = vmatprep.subr.bf16.mxu0 0
    %304 = vmatpush1.bf16.msra.mxu0 0
    %305 = vmatprep.subr.bf16.mxu0 0
    %306 = vmatpush1.bf16.msra.mxu0 0
    %307 = vmatprep.subr.bf16.mxu0 0
    %308 = vmatpush1.bf16.msra.mxu0 0
    %309 = vmatprep.subr.bf16.mxu0 0
    %310 = vmatpush1.bf16.msra.mxu0 0
    %311 = vmatprep.subr.bf16.mxu0 0
    %312 = vmatpush1.bf16.msra.mxu0 0
    %313 = vmatprep.subr.bf16.mxu0 0
    %314 = vmatpush1.bf16.msra.mxu0 0
    %315 = vmatprep.subr.bf16.mxu0 0
    %316 = vmatpush1.bf16.msra.mxu0 0
    %317 = vmatprep.mubr.bf16.mxu0 0
    %318 = vmatmul.mubr.bf16.gmra.mrb[0].mxu0 %v283
    %v319 = vpop.f32.mrb[0].mxu0
    %v320 = vadd.f32 %v238, %v319
    %v321 = vpop.f32.mrb[0].mxu0
    %v322 = vadd.f32 %v242, %v321
    %v323 = vpop.f32.mrb[0].mxu0
    %v324 = vpop.f32.mrb[0].mxu0
    %325 = vdwg.mxu0
    %326 = vmatprep.subr.bf16.mxu0 0
    %327 = vmatpush1.bf16.msra.mxu0 %v272
    %328 = vmatprep.subr.bf16.mxu0 0
    %329 = vmatpush1.bf16.msra.mxu0 %v275
    %330 = vmatprep.subr.bf16.mxu0 0
    %331 = vmatpush1.bf16.msra.mxu0 0
    %332 = vmatprep.subr.bf16.mxu0 0
    %333 = vmatpush1.bf16.msra.mxu0 0
    %334 = vmatprep.subr.bf16.mxu0 0
    %335 = vmatpush1.bf16.msra.mxu0 0
    %336 = vmatprep.subr.bf16.mxu0 0
    %337 = vmatpush1.bf16.msra.mxu0 0
    %338 = vmatprep.subr.bf16.mxu0 0
    %339 = vmatpush1.bf16.msra.mxu0 0
    %340 = vmatprep.subr.bf16.mxu0 0
    %341 = vmatpush1.bf16.msra.mxu0 0
    %342 = vmatprep.subr.bf16.mxu0 0
    %343 = vmatpush1.bf16.msra.mxu0 0
    %344 = vmatprep.subr.bf16.mxu0 0
    %345 = vmatpush1.bf16.msra.mxu0 0
    %346 = vmatprep.subr.bf16.mxu0 0
    %347 = vmatpush1.bf16.msra.mxu0 0
    %348 = vmatprep.subr.bf16.mxu0 0
    %349 = vmatpush1.bf16.msra.mxu0 0
    %350 = vmatprep.subr.bf16.mxu0 0
    %351 = vmatpush1.bf16.msra.mxu0 0
    %352 = vmatprep.subr.bf16.mxu0 0
    %353 = vmatpush1.bf16.msra.mxu0 0
    %354 = vmatprep.subr.bf16.mxu0 0
    %355 = vmatpush1.bf16.msra.mxu0 0
    %356 = vmatprep.subr.bf16.mxu0 0
    %357 = vmatpush1.bf16.msra.mxu0 0
    %358 = vmatprep.mubr.bf16.mxu0 0
    %359 = vmatmul.mubr.bf16.gmra.mrb[0].mxu0 %v283
    %v360 = vpop.f32.mrb[0].mxu0
    %v361 = vadd.f32 %v246, %v360
    %v362 = vpop.f32.mrb[0].mxu0
    %v363 = vpop.f32.mrb[0].mxu0
    %v364 = vpop.f32.mrb[0].mxu0
    %365 = vdwg.mxu0
    %v366 = vtanh.pop %v320
    %v367 = vtanh.pop %v322
    %v368 = vtanh.pop %v361
    %v369 = vmul.f32 %v220, %v366
    %v370 = vmul.f32 %v221, %v367
    %v371 = vmul.f32 %v222, %v368
    %v372 = vadd.f32 %v369, %v370
    %v373 = vadd.f32 %v372, %v371
    %v374 = vtanh.pop %v373
    %375 = vst [vmem:[#allocation10] sm:$0xff] %v374
    // Predicated region
    $region42: #{tpu_custom_call.1} parent=1 // pred_check
      _
    $region43: #{tpu_custom_call.1} parent=1 // pred_check_branch
      %377 = sbr.rel (0) target = $region45
    $region44: #{tpu_custom_call.1} parent=1 // pred_region
      %s379 = ssub.s32 128, 128
      %380 = vsyncadd [#allocation4], %s379
      %s382 = sshll.u32 [#allocation10], 4
      %s383 = int_to_ptr.vmem [resolvable:$true] %s382
      %385 = dma.vmem_to_hbm [thread:$0]  %s383, 128, %s6, [#allocation4]
    $region45: #{tpu_custom_call.1} parent=1 // pred_fallthru
      _
    // Predicated region
    $region46: #{tpu_custom_call.1} parent=1 // pred_check
      _
    $region47: #{tpu_custom_call.1} parent=1 // pred_check_branch
      %387 = sbr.rel (0) target = $region49
    $region48: #{tpu_custom_call.1} parent=1 // pred_region
      %388 = dma.done [#allocation4], 128
    $region49: #{tpu_custom_call.1} parent=1 // pred_fallthru
      _
    %389 = vsyncpa [#allocation3], 1
    %390 = vsyncpa [#allocation6], 1
    %391 = vsyncpa [#allocation9], 1
    %392 = vsyncpa [#allocation4], 1

</llo_original>
